<compile_context>
chip_gen: v7x
topology: tpu7x:2x2x1
jax: 0.10.0
libtpu: 0.0.40
codegen_flags: <defaults>
</compile_context>

<pallas_src>
import functools

import jax
import jax.numpy as jnp
from jax.experimental import pallas as pl
from jax.experimental.pallas import tpu as pltpu


def _fused_kernel(w_ref, g_ref, xs_ref, f_ref, z_ref):
    # w_ref : (1, KB)       weight chunk for this k tile (lane-dense)
    # g_ref : (RB, N, KB)   g tile (g viewed as (N, N, n2)), double-buffered
    # xs_ref: (1, N)        x.sum(-1), resident across the whole grid
    # f_ref : (RB, N)       f rows; accumulator resident across the k axis
    # z_ref : (RB, 1)       z rows; written on the last k step
    k = pl.program_id(1)
    last_k = pl.num_programs(1) - 1

    # Squared weights: a handful of VPU ops, fully hidden under the g DMA.
    wsq = w_ref[...] * w_ref[...]                               # (1, KB)

    # Partial f rows: VPU multiply + XLU lane reduce (no 1-wide MXU matvec).
    partial = jnp.sum(g_ref[...] * wsq, axis=-1)                # (RB, N)

    @pl.when(k == 0)
    def _():
        f_ref[...] = partial

    @pl.when(k > 0)
    def _():
        f_ref[...] = f_ref[...] + partial

    @pl.when(k == last_k)
    def _():
        # Row-wise numerically stable softmax; rows are complete in this tile.
        f_blk = f_ref[...]
        m = jnp.max(f_blk, axis=-1, keepdims=True)              # (RB, 1)
        p = jnp.exp(f_blk - m)                                  # (RB, N)
        denom = jnp.sum(p, axis=-1, keepdims=True)              # (RB, 1)
        w_blk = p / denom            # exact divide: free in an HBM-bound kernel
        # z = (w @ x).sum(-1) == w @ x.sum(-1); x.sum(-1) precomputed outside.
        z_ref[...] = jnp.sum(w_blk * xs_ref[...], axis=-1, keepdims=True)


def _round_up(v, m):
    return (v + m - 1) // m * m


def _vmem_capacity_bytes():
    """Per-core VMEM capacity; conservative fallback (v7x = 64 MiB)."""
    try:
        info = pltpu.get_tpu_info()
        cap = getattr(info, "vmem_capacity_bytes", None)
        if cap:
            return int(cap)
    except Exception:
        pass
    return 64 * 1024 * 1024


def _pick_tiles(N, n2, per_buf_budget, g_total_bytes):
    """Choose (row_block, k_block) for the (N//RB, n2//KB) grid."""
    rbs = sorted({rb for rb in range(8, N, 8) if N % rb == 0} | {N}, reverse=True)
    kbs = sorted({kb for kb in range(128, n2, 128) if n2 % kb == 0} | {n2},
                 reverse=True)

    def fits(rb, kb):  # padded f32 tile bytes vs per-buffer budget
        return rb * _round_up(N, 8) * _round_up(kb, 128) * 4 <= per_buf_budget

    # 1) Prefer the full reduction axis per step: largest row block that fits.
    fitting = [rb for rb in rbs if fits(rb, n2)]
    if fitting:
        rb = fitting[0]
        # v7x has 2 TensorCores: don't collapse the "parallel" axis to a single
        # grid step once g is big enough for a split to matter.  On 1-TC chips
        # the extra ~0.35us grid step is noise.
        if rb == N and g_total_bytes > (1 << 20):
            smaller = [r for r in fitting if r < N]
            if smaller:
                rb = smaller[0]
        return rb, n2
    # 2) Large N: even one row block at full n2 overflows the budget -> tile
    #    the n2 reduction axis (inner "arbitrary" grid dim, f accumulated).
    rb = rbs[-1]                       # smallest legal row block (8 if N % 8 == 0)
    for kb in kbs:
        if fits(rb, kb):
            return rb, kb
    return rb, kbs[-1]                 # smallest legal k block; stays compilable


def _vmem_limit_bytes(N, n2, RB, KB, vmem_cap):
    """Derive the scoped-VMEM limit from actual (padded, double-buffered) usage."""
    f32 = 4
    g_tile = RB * _round_up(N, 8) * _round_up(KB, 128) * f32
    w_tile = 8 * _round_up(KB, 128) * f32
    xs_tile = 8 * _round_up(N, 128) * f32
    f_tile = _round_up(RB, 8) * _round_up(N, 128) * f32
    z_tile = _round_up(RB, 8) * 128 * f32
    # All BlockSpec operands keep the default Buffered(2) -> 2x each.
    usage = 2 * (g_tile + w_tile + xs_tile + f_tile + z_tile)
    limit = usage + 8 * 1024 * 1024            # headroom for Mosaic internal scratch
    limit = max(limit, 16 * 1024 * 1024)       # don't starve the compiler
    limit = min(limit, vmem_cap - 16 * 1024 * 1024)   # never claim the full VMEM
    return int(limit)


@functools.partial(jax.jit, static_argnames=("N", "row_block", "k_block"))
def model_forward(x, g, weights, N, row_block=None, k_block=None):
    n2 = N * N
    vmem_cap = _vmem_capacity_bytes()
    # Per-buffer budget for the double-buffered g tile, generation-aware:
    # ~10 MiB on v7x (64 MiB VMEM), ~21 MiB on v5e/v6e (128 MiB VMEM).
    per_buf_budget = min(24 << 20, max(8 << 20, vmem_cap // 6))
    g_total_bytes = n2 * n2 * 4
    RB, KB = _pick_tiles(N, n2, per_buf_budget, g_total_bytes)
    if row_block is not None:
        RB = row_block
    if k_block is not None:
        KB = k_block
    assert N % RB == 0 and (RB % 8 == 0 or RB == N), "bad row block"
    assert n2 % KB == 0 and (KB % 128 == 0 or KB == n2), "bad k block"

    g3 = g.reshape(N, N, n2)        # free row-major view: g3[r, c, k] = g[r*N + c, k]
    wrow = weights.reshape(1, n2)   # lane-dense squared-weight source
    xs = jnp.sum(x, axis=-1).reshape(1, N)   # x.sum(-1): reduced once, tiny resident

    f_mat, z_col = pl.pallas_call(
        _fused_kernel,
        out_shape=(
            jax.ShapeDtypeStruct((N, N), jnp.float32),
            jax.ShapeDtypeStruct((N, 1), jnp.float32),
        ),
        grid=(N // RB, n2 // KB),
        in_specs=[
            pl.BlockSpec((1, KB), lambda i, k: (0, k)),         # weights chunk
            pl.BlockSpec((RB, N, KB), lambda i, k: (i, 0, k)),  # g tile (pipelined)
            pl.BlockSpec((1, N), lambda i, k: (0, 0)),          # x.sum(-1) (resident)
        ],
        out_specs=(
            pl.BlockSpec((RB, N), lambda i, k: (i, 0)),         # f rows / accumulator
            pl.BlockSpec((RB, 1), lambda i, k: (i, 0)),         # z rows
        ),
        compiler_params=pltpu.CompilerParams(
            dimension_semantics=("parallel", "arbitrary"),
            vmem_limit_bytes=_vmem_limit_bytes(N, n2, RB, KB, vmem_cap),
        ),
    )(wrow, g3, xs)

    return z_col.reshape(N), f_mat.reshape(n2, 1)


if __name__ == "__main__":
    N = 16          # input_size
    M = 32          # feature width of x
    n2 = N * N

    key = jax.random.PRNGKey(0)
    k_w, k_g, k_x = jax.random.split(key, 3)

    # xavier_normal_ on a (N*N, 1) tensor: std = sqrt(2 / (fan_in + fan_out))
    std = (2.0 / (n2 + 1)) ** 0.5
    weights = jax.random.normal(k_w, (n2, 1), dtype=jnp.float32) * std
    g = jax.random.normal(k_g, (n2, n2), dtype=jnp.float32)
    x = jax.random.normal(k_x, (N, M), dtype=jnp.float32)

    # Pure-JAX reference of the forward semantics.
    f_ref = g @ (weights ** 2)
    w_ref = jax.nn.softmax(f_ref.reshape(N, N), axis=-1)
    z_ref = (w_ref @ x).sum(-1)

    # 1) Auto-tiled path (tiny demo problem -> single grid step).
    z, f = model_forward(x, g, weights, N)
    jax.block_until_ready((z, f))
    assert z.shape == (N,) and f.shape == (n2, 1)
    assert jnp.allclose(f, f_ref, atol=1e-5, rtol=1e-5), "f mismatch (auto tiles)"
    # z uses exact division now; only the mathematically identical
    # (w @ x).sum(-1) -> w @ x.sum(-1) reassociation changes rounding.
    assert jnp.allclose(z, z_ref, atol=1e-4, rtol=1e-4), "z mismatch (auto tiles)"

    # 2) Forced tiling exercises the pipelined row axis AND the n2-accumulation
    #    path: grid = (2, 2).
    z2, f2 = model_forward(x, g, weights, N, row_block=8, k_block=128)
    jax.block_until_ready((z2, f2))
    assert jnp.allclose(f2, f_ref, atol=1e-5, rtol=1e-5), "f mismatch (tiled)"
    assert jnp.allclose(z2, z_ref, atol=1e-4, rtol=1e-4), "z mismatch (tiled)"

    print("KERNEL_OK")
</pallas_src>

<mosaic_0001>
module attributes {stable_mosaic.version = 11 : i64} {
  func.func @_fused_kernel(%arg0: i32, %arg1: i32, %arg2: memref<1x256xf32, #tpu.memory_space<vmem>>, %arg3: memref<16x16x256xf32, #tpu.memory_space<vmem>>, %arg4: memref<1x16xf32, #tpu.memory_space<vmem>>, %arg5: memref<16x16xf32, #tpu.memory_space<vmem>>, %arg6: memref<16x1xf32, #tpu.memory_space<vmem>>) attributes {dimension_semantics = [#tpu.dimension_semantics<parallel>, #tpu.dimension_semantics<arbitrary>], iteration_bounds = array<i64: 1, 1>, scalar_prefetch = 0 : i64, scratch_operands = 0 : i64, tpu.core_type = #tpu.core_type<tc>, window_params = [{transform_indices = @transform_0, window_bounds = array<i64: 1, 256>}, {transform_indices = @transform_1, window_bounds = array<i64: 16, 16, 256>}, {pipeline_mode = #tpu.pipeline_mode<synchronous>, transform_indices = @transform_2, window_bounds = array<i64: 1, 16>}, {transform_indices = @transform_3, window_bounds = array<i64: 16, 16>}, {transform_indices = @transform_4, window_bounds = array<i64: 16, 1>}]} {
    %c0 = arith.constant 0 : index
    %c0_0 = arith.constant 0 : index
    %0 = vector.load %arg2[%c0, %c0_0] : memref<1x256xf32, #tpu.memory_space<vmem>>, vector<1x256xf32>
    %c0_1 = arith.constant 0 : index
    %c0_2 = arith.constant 0 : index
    %1 = vector.load %arg2[%c0_1, %c0_2] : memref<1x256xf32, #tpu.memory_space<vmem>>, vector<1x256xf32>
    %2 = arith.mulf %0, %1 : vector<1x256xf32>
    %c0_3 = arith.constant 0 : index
    %c0_4 = arith.constant 0 : index
    %c0_5 = arith.constant 0 : index
    %3 = vector.load %arg3[%c0_3, %c0_4, %c0_5] : memref<16x16x256xf32, #tpu.memory_space<vmem>>, vector<16x16x256xf32>
    %4 = vector.shape_cast %2 : vector<1x256xf32> to vector<1x1x256xf32>
    %5 = vector.broadcast %4 : vector<1x1x256xf32> to vector<16x16x256xf32>
    %6 = arith.mulf %3, %5 : vector<16x16x256xf32>
    %cst = arith.constant dense<0.000000e+00> : vector<16x16xf32>
    %7 = vector.multi_reduction <add>, %6, %cst [2] : vector<16x16x256xf32> to vector<16x16xf32>
    %c0_i32 = arith.constant 0 : i32
    %8 = arith.cmpi eq, %arg1, %c0_i32 : i32
    %9 = arith.extui %8 : i1 to i32
    %c0_i32_6 = arith.constant 0 : i32
    %10 = arith.cmpi ne, %9, %c0_i32_6 : i32
    scf.if %10 {
      %c0_11 = arith.constant 0 : index
      %c0_12 = arith.constant 0 : index
      %17 = vector.load %arg5[%c0_11, %c0_12] : memref<16x16xf32, #tpu.memory_space<vmem>>, vector<16x16xf32>
      tpu.vector_store %arg5[%c0_11, %c0_12], %7 {strides = array<i32>} : memref<16x16xf32, #tpu.memory_space<vmem>>, vector<16x16xf32>,
    } else {
    }
    %c0_i32_7 = arith.constant 0 : i32
    %11 = arith.cmpi sgt, %arg1, %c0_i32_7 : i32
    %12 = arith.extui %11 : i1 to i32
    %c0_i32_8 = arith.constant 0 : i32
    %13 = arith.cmpi ne, %12, %c0_i32_8 : i32
    scf.if %13 {
      %c0_11 = arith.constant 0 : index
      %c0_12 = arith.constant 0 : index
      %17 = vector.load %arg5[%c0_11, %c0_12] : memref<16x16xf32, #tpu.memory_space<vmem>>, vector<16x16xf32>
      %18 = arith.addf %17, %7 : vector<16x16xf32>
      %c0_13 = arith.constant 0 : index
      %c0_14 = arith.constant 0 : index
      %19 = vector.load %arg5[%c0_13, %c0_14] : memref<16x16xf32, #tpu.memory_space<vmem>>, vector<16x16xf32>
      tpu.vector_store %arg5[%c0_13, %c0_14], %18 {strides = array<i32>} : memref<16x16xf32, #tpu.memory_space<vmem>>, vector<16x16xf32>,
    } else {
    }
    %c0_i32_9 = arith.constant 0 : i32
    %14 = arith.cmpi eq, %arg1, %c0_i32_9 : i32
    %15 = arith.extui %14 : i1 to i32
    %c0_i32_10 = arith.constant 0 : i32
    %16 = arith.cmpi ne, %15, %c0_i32_10 : i32
    scf.if %16 {
      %c0_11 = arith.constant 0 : index
      %c0_12 = arith.constant 0 : index
      %17 = vector.load %arg5[%c0_11, %c0_12] : memref<16x16xf32, #tpu.memory_space<vmem>>, vector<16x16xf32>
      %cst_13 = arith.constant dense<0xFF800000> : vector<16xf32>
      %18 = vector.multi_reduction <maximumf>, %17, %cst_13 [1] : vector<16x16xf32> to vector<16xf32>
      %19 = vector.shape_cast %18 : vector<16xf32> to vector<16x1xf32>
      %20 = vector.broadcast %19 : vector<16x1xf32> to vector<16x16xf32>
      %21 = arith.subf %17, %20 : vector<16x16xf32>
      %22 = math.exp %21 : vector<16x16xf32>
      %cst_14 = arith.constant dense<0.000000e+00> : vector<16xf32>
      %23 = vector.multi_reduction <add>, %22, %cst_14 [1] : vector<16x16xf32> to vector<16xf32>
      %24 = vector.shape_cast %23 : vector<16xf32> to vector<16x1xf32>
      %25 = vector.broadcast %24 : vector<16x1xf32> to vector<16x16xf32>
      %26 = arith.divf %22, %25 : vector<16x16xf32>
      %c0_15 = arith.constant 0 : index
      %c0_16 = arith.constant 0 : index
      %27 = vector.load %arg4[%c0_15, %c0_16] : memref<1x16xf32, #tpu.memory_space<vmem>>, vector<1x16xf32>
      %28 = vector.broadcast %27 : vector<1x16xf32> to vector<16x16xf32>
      %29 = arith.mulf %26, %28 : vector<16x16xf32>
      %cst_17 = arith.constant dense<0.000000e+00> : vector<16xf32>
      %30 = vector.multi_reduction <add>, %29, %cst_17 [1] : vector<16x16xf32> to vector<16xf32>
      %31 = vector.shape_cast %30 : vector<16xf32> to vector<16x1xf32>
      %c0_18 = arith.constant 0 : index
      %c0_19 = arith.constant 0 : index
      %32 = vector.load %arg6[%c0_18, %c0_19] : memref<16x1xf32, #tpu.memory_space<vmem>>, vector<16x1xf32>
      tpu.vector_store %arg6[%c0_18, %c0_19], %31 {strides = array<i32>} : memref<16x1xf32, #tpu.memory_space<vmem>>, vector<16x1xf32>,
    } else {
    }
    return
  }
  func.func @transform_0(%arg0: i32, %arg1: i32) -> (i32, i32) {
    %c0_i32 = arith.constant 0 : i32
    %c0_i32_0 = arith.constant 0 : i32
    return %c0_i32, %arg1 : i32, i32
  }
  func.func @transform_1(%arg0: i32, %arg1: i32) -> (i32, i32, i32) {
    %c0_i32 = arith.constant 0 : i32
    %c0_i32_0 = arith.constant 0 : i32
    return %arg0, %c0_i32, %arg1 : i32, i32, i32
  }
  func.func @transform_2(%arg0: i32, %arg1: i32) -> (i32, i32) {
    %c0_i32 = arith.constant 0 : i32
    %c0_i32_0 = arith.constant 0 : i32
    %c0_i32_1 = arith.constant 0 : i32
    return %c0_i32, %c0_i32_0 : i32, i32
  }
  func.func @transform_3(%arg0: i32, %arg1: i32) -> (i32, i32) {
    %c0_i32 = arith.constant 0 : i32
    %c0_i32_0 = arith.constant 0 : i32
    return %arg0, %c0_i32 : i32, i32
  }
  func.func @transform_4(%arg0: i32, %arg1: i32) -> (i32, i32) {
    %c0_i32 = arith.constant 0 : i32
    %c0_i32_0 = arith.constant 0 : i32
    return %arg0, %c0_i32 : i32, i32
  }
}

</mosaic_0001>

<llo_original>
// kernel: model_forward.1
$region0: #{model_forward.1}
  #allocation0 [shape = 'u32[]', space=smem, size = 0x4, offset = 0x4, fixed_abs, tag = 'smem constant byte address 0x4 - core index']
  #allocation1 [shape = 'u32[144,128]{1,0:T(1,128)}', space=vmem, size = 0x12000, scoped, tag = 'internal scratch']
  %s0 = inlined_call_operand.vmem [shape: f32[1,256], index: 0, kind: input, shape index: {}]
  %s1 = inlined_call_operand.hbm [shape: f32[16,16,256], index: 1, kind: input, shape index: {}]
  %s2 = inlined_call_operand.vmem [shape: f32[1,16], index: 2, kind: input, shape index: {}]
  %s3 = inlined_call_operand.vmem [shape: f32[16,16], index: 3, kind: output, shape index: {0}]
  %s4 = inlined_call_operand.vmem [shape: f32[16,1], index: 4, kind: output, shape index: {1}]
  %5 = xla_tuple %s3, %s4
  %s6 = sld [smem:[#allocation0]]
  $region46: #{model_forward.1} parent=0
    _
  %s8 = ssub.s32 1, %s6
  %s9 = scalar_select 0, %s8, %s6
  $region1: #{model_forward.1} parent=0
    #allocation2 [shape = 'u8[262144]{0}', space=vmem, size = 0x40000, scoped, tag = 'input window, operand 1, single buffered']
    #allocation3 [shape = 's32[1]{0}', space=sflag, size = 0x4, scoped, tag = 'scoped memory for model_forward.1']
    %10 = vsyncpa [#allocation3], 0
    // Predicated region
    $region2: #{model_forward.1} parent=1 // pred_check
      _
    $region3: #{model_forward.1} parent=1 // pred_check_branch
      %12 = sbr.rel (0) target = $region5
    $region4: #{model_forward.1} parent=1 // pred_region
      _
    $region5: #{model_forward.1} parent=1 // pred_fallthru
      _
    // Predicated region
    $region6: #{model_forward.1} parent=1 // pred_check
      _
    $region7: #{model_forward.1} parent=1 // pred_check_branch
      %14 = sbr.rel (0) target = $region9
    $region8: #{model_forward.1} parent=1 // pred_region
      %s16 = ssub.s32 8192, 8192
      %17 = vsyncadd [#allocation3], %s16
      %s18 = sshll.u32 [#allocation2], 4
      %s19 = int_to_ptr.vmem [resolvable:$true] %s18
      %24 = dma.hbm_to_vmem [thread:$0]  %s1, 8192, %s19, [#allocation3], 256, 256, 16
    $region9: #{model_forward.1} parent=1 // pred_fallthru
      _
    // Predicated region
    $region10: #{model_forward.1} parent=1 // pred_check
      _
    $region11: #{model_forward.1} parent=1 // pred_check_branch
      %26 = sbr.rel (0) target = $region13
    $region12: #{model_forward.1} parent=1 // pred_region
      _
    $region13: #{model_forward.1} parent=1 // pred_fallthru
      _
    // Predicated region
    $region14: #{model_forward.1} parent=1 // pred_check
      _
    $region15: #{model_forward.1} parent=1 // pred_check_branch
      %28 = sbr.rel (0) target = $region17
    $region16: #{model_forward.1} parent=1 // pred_region
      %29 = dma.done [#allocation3], 8192
    $region17: #{model_forward.1} parent=1 // pred_fallthru
      _
    %v30 = vld [vmem:[%s0] sm:$0x3]
    %v31 = vmul.f32 %v30, %v30
    %v32 = vld [vmem:[#allocation2] sm:$0xff]
    %v33 = vld [vmem:[#allocation2 + $0x8] sm:$0xff]
    %v34 = vld [vmem:[#allocation2 + $0x10] sm:$0xff]
    %v35 = vld [vmem:[#allocation2 + $0x18] sm:$0xff]
    %v36 = vld [vmem:[#allocation2 + $0x20] sm:$0xff]
    %v37 = vld [vmem:[#allocation2 + $0x28] sm:$0xff]
    %v38 = vld [vmem:[#allocation2 + $0x30] sm:$0xff]
    %v39 = vld [vmem:[#allocation2 + $0x38] sm:$0xff]
    %v40 = vld [vmem:[#allocation2 + $0x40] sm:$0xff]
    %v41 = vld [vmem:[#allocation2 + $0x48] sm:$0xff]
    %v42 = vld [vmem:[#allocation2 + $0x50] sm:$0xff]
    %v43 = vld [vmem:[#allocation2 + $0x58] sm:$0xff]
    %v44 = vld [vmem:[#allocation2 + $0x60] sm:$0xff]
    %v45 = vld [vmem:[#allocation2 + $0x68] sm:$0xff]
    %v46 = vld [vmem:[#allocation2 + $0x70] sm:$0xff]
    %v47 = vld [vmem:[#allocation2 + $0x78] sm:$0xff]
    %v48 = vld [vmem:[#allocation2 + $0x80] sm:$0xff]
    %v49 = vld [vmem:[#allocation2 + $0x88] sm:$0xff]
    %v50 = vld [vmem:[#allocation2 + $0x90] sm:$0xff]
    %v51 = vld [vmem:[#allocation2 + $0x98] sm:$0xff]
    %v52 = vld [vmem:[#allocation2 + $0xa0] sm:$0xff]
    %v53 = vld [vmem:[#allocation2 + $0xa8] sm:$0xff]
    %v54 = vld [vmem:[#allocation2 + $0xb0] sm:$0xff]
    %v55 = vld [vmem:[#allocation2 + $0xb8] sm:$0xff]
    %v56 = vld [vmem:[#allocation2 + $0xc0] sm:$0xff]
    %v57 = vld [vmem:[#allocation2 + $0xc8] sm:$0xff]
    %v58 = vld [vmem:[#allocation2 + $0xd0] sm:$0xff]
    %v59 = vld [vmem:[#allocation2 + $0xd8] sm:$0xff]
    %v60 = vld [vmem:[#allocation2 + $0xe0] sm:$0xff]
    %v61 = vld [vmem:[#allocation2 + $0xe8] sm:$0xff]
    %v62 = vld [vmem:[#allocation2 + $0xf0] sm:$0xff]
    %v63 = vld [vmem:[#allocation2 + $0xf8] sm:$0xff]
    %v64 = vld [vmem:[#allocation2 + $0x100] sm:$0xff]
    %v65 = vld [vmem:[#allocation2 + $0x108] sm:$0xff]
    %v66 = vld [vmem:[#allocation2 + $0x110] sm:$0xff]
    %v67 = vld [vmem:[#allocation2 + $0x118] sm:$0xff]
    %v68 = vld [vmem:[#allocation2 + $0x120] sm:$0xff]
    %v69 = vld [vmem:[#allocation2 + $0x128] sm:$0xff]
    %v70 = vld [vmem:[#allocation2 + $0x130] sm:$0xff]
    %v71 = vld [vmem:[#allocation2 + $0x138] sm:$0xff]
    %v72 = vld [vmem:[#allocation2 + $0x140] sm:$0xff]
    %v73 = vld [vmem:[#allocation2 + $0x148] sm:$0xff]
    %v74 = vld [vmem:[#allocation2 + $0x150] sm:$0xff]
    %v75 = vld [vmem:[#allocation2 + $0x158] sm:$0xff]
    %v76 = vld [vmem:[#allocation2 + $0x160] sm:$0xff]
    %v77 = vld [vmem:[#allocation2 + $0x168] sm:$0xff]
    %v78 = vld [vmem:[#allocation2 + $0x170] sm:$0xff]
    %v79 = vld [vmem:[#allocation2 + $0x178] sm:$0xff]
    %v80 = vld [vmem:[#allocation2 + $0x180] sm:$0xff]
    %v81 = vld [vmem:[#allocation2 + $0x188] sm:$0xff]
    %v82 = vld [vmem:[#allocation2 + $0x190] sm:$0xff]
    %v83 = vld [vmem:[#allocation2 + $0x198] sm:$0xff]
    %v84 = vld [vmem:[#allocation2 + $0x1a0] sm:$0xff]
    %v85 = vld [vmem:[#allocation2 + $0x1a8] sm:$0xff]
    %v86 = vld [vmem:[#allocation2 + $0x1b0] sm:$0xff]
    %v87 = vld [vmem:[#allocation2 + $0x1b8] sm:$0xff]
    %v88 = vld [vmem:[#allocation2 + $0x1c0] sm:$0xff]
    %v89 = vld [vmem:[#allocation2 + $0x1c8] sm:$0xff]
    %v90 = vld [vmem:[#allocation2 + $0x1d0] sm:$0xff]
    %v91 = vld [vmem:[#allocation2 + $0x1d8] sm:$0xff]
    %v92 = vld [vmem:[#allocation2 + $0x1e0] sm:$0xff]
    %v93 = vld [vmem:[#allocation2 + $0x1e8] sm:$0xff]
    %v94 = vld [vmem:[#allocation2 + $0x1f0] sm:$0xff]
    %v95 = vld [vmem:[#allocation2 + $0x1f8] sm:$0xff]
    %v97 = vlaneseq
    %v98 = vshrl.u32 %v97, 7
    %v99 = vsub.s32 0, %v98
    %v100 = vrot.slane %v31, %v99
    %v101 = vlaneseq
    %v102 = vshrl.u32 %v101, 7
    %v103 = vsub.s32 1, %v102
    %v104 = vrot.slane %v31, %v103
    %v107 = vmul.f32 %v32, %v100
    %v108 = vmul.f32 %v33, %v104
    %v109 = vmul.f32 %v34, %v100
    %v110 = vmul.f32 %v35, %v104
    %v111 = vmul.f32 %v36, %v100
    %v112 = vmul.f32 %v37, %v104
    %v113 = vmul.f32 %v38, %v100
    %v114 = vmul.f32 %v39, %v104
    %v115 = vmul.f32 %v40, %v100
    %v116 = vmul.f32 %v41, %v104
    %v117 = vmul.f32 %v42, %v100
    %v118 = vmul.f32 %v43, %v104
    %v119 = vmul.f32 %v44, %v100
    %v120 = vmul.f32 %v45, %v104
    %v121 = vmul.f32 %v46, %v100
    %v122 = vmul.f32 %v47, %v104
    %v123 = vmul.f32 %v48, %v100
    %v124 = vmul.f32 %v49, %v104
    %v125 = vmul.f32 %v50, %v100
    %v126 = vmul.f32 %v51, %v104
    %v127 = vmul.f32 %v52, %v100
    %v128 = vmul.f32 %v53, %v104
    %v129 = vmul.f32 %v54, %v100
    %v130 = vmul.f32 %v55, %v104
    %v131 = vmul.f32 %v56, %v100
    %v132 = vmul.f32 %v57, %v104
    %v133 = vmul.f32 %v58, %v100
    %v134 = vmul.f32 %v59, %v104
    %v135 = vmul.f32 %v60, %v100
    %v136 = vmul.f32 %v61, %v104
    %v137 = vmul.f32 %v62, %v100
    %v138 = vmul.f32 %v63, %v104
    %v139 = vmul.f32 %v64, %v100
    %v140 = vmul.f32 %v65, %v104
    %v141 = vmul.f32 %v66, %v100
    %v142 = vmul.f32 %v67, %v104
    %v143 = vmul.f32 %v68, %v100
    %v144 = vmul.f32 %v69, %v104
    %v145 = vmul.f32 %v70, %v100
    %v146 = vmul.f32 %v71, %v104
    %v147 = vmul.f32 %v72, %v100
    %v148 = vmul.f32 %v73, %v104
    %v149 = vmul.f32 %v74, %v100
    %v150 = vmul.f32 %v75, %v104
    %v151 = vmul.f32 %v76, %v100
    %v152 = vmul.f32 %v77, %v104
    %v153 = vmul.f32 %v78, %v100
    %v154 = vmul.f32 %v79, %v104
    %v155 = vmul.f32 %v80, %v100
    %v156 = vmul.f32 %v81, %v104
    %v157 = vmul.f32 %v82, %v100
    %v158 = vmul.f32 %v83, %v104
    %v159 = vmul.f32 %v84, %v100
    %v160 = vmul.f32 %v85, %v104
    %v161 = vmul.f32 %v86, %v100
    %v162 = vmul.f32 %v87, %v104
    %v163 = vmul.f32 %v88, %v100
    %v164 = vmul.f32 %v89, %v104
    %v165 = vmul.f32 %v90, %v100
    %v166 = vmul.f32 %v91, %v104
    %v167 = vmul.f32 %v92, %v100
    %v168 = vmul.f32 %v93, %v104
    %v169 = vmul.f32 %v94, %v100
    %v170 = vmul.f32 %v95, %v104
    %v171 = vadd.f32 %v107, %v108
    %172 = vadd.xlane.f32.xlu0 %v171
    %v173 = vpop.xlane.xlu0 %172
    %v174 = vadd.f32 %v109, %v110
    %175 = vadd.xlane.f32.xlu0 %v174
    %v176 = vpop.xlane.xlu0 %175
    %v177 = vadd.f32 %v111, %v112
    %178 = vadd.xlane.f32.xlu0 %v177
    %v179 = vpop.xlane.xlu0 %178
    %v180 = vadd.f32 %v113, %v114
    %181 = vadd.xlane.f32.xlu0 %v180
    %v182 = vpop.xlane.xlu0 %181
    %v183 = vadd.f32 %v115, %v116
    %184 = vadd.xlane.f32.xlu0 %v183
    %v185 = vpop.xlane.xlu0 %184
    %v186 = vadd.f32 %v117, %v118
    %187 = vadd.xlane.f32.xlu0 %v186
    %v188 = vpop.xlane.xlu0 %187
    %v189 = vadd.f32 %v119, %v120
    %190 = vadd.xlane.f32.xlu0 %v189
    %v191 = vpop.xlane.xlu0 %190
    %v192 = vadd.f32 %v121, %v122
    %193 = vadd.xlane.f32.xlu0 %v192
    %v194 = vpop.xlane.xlu0 %193
    %v195 = vadd.f32 %v123, %v124
    %196 = vadd.xlane.f32.xlu0 %v195
    %v197 = vpop.xlane.xlu0 %196
    %v198 = vadd.f32 %v125, %v126
    %199 = vadd.xlane.f32.xlu0 %v198
    %v200 = vpop.xlane.xlu0 %199
    %v201 = vadd.f32 %v127, %v128
    %202 = vadd.xlane.f32.xlu0 %v201
    %v203 = vpop.xlane.xlu0 %202
    %v204 = vadd.f32 %v129, %v130
    %205 = vadd.xlane.f32.xlu0 %v204
    %v206 = vpop.xlane.xlu0 %205
    %v207 = vadd.f32 %v131, %v132
    %208 = vadd.xlane.f32.xlu0 %v207
    %v209 = vpop.xlane.xlu0 %208
    %v210 = vadd.f32 %v133, %v134
    %211 = vadd.xlane.f32.xlu0 %v210
    %v212 = vpop.xlane.xlu0 %211
    %v213 = vadd.f32 %v135, %v136
    %214 = vadd.xlane.f32.xlu0 %v213
    %v215 = vpop.xlane.xlu0 %214
    %v216 = vadd.f32 %v137, %v138
    %217 = vadd.xlane.f32.xlu0 %v216
    %v218 = vpop.xlane.xlu0 %217
    %v219 = vadd.f32 %v139, %v140
    %220 = vadd.xlane.f32.xlu0 %v219
    %v221 = vpop.xlane.xlu0 %220
    %v222 = vadd.f32 %v141, %v142
    %223 = vadd.xlane.f32.xlu0 %v222
    %v224 = vpop.xlane.xlu0 %223
    %v225 = vadd.f32 %v143, %v144
    %226 = vadd.xlane.f32.xlu0 %v225
    %v227 = vpop.xlane.xlu0 %226
    %v228 = vadd.f32 %v145, %v146
    %229 = vadd.xlane.f32.xlu0 %v228
    %v230 = vpop.xlane.xlu0 %229
    %v231 = vadd.f32 %v147, %v148
    %232 = vadd.xlane.f32.xlu0 %v231
    %v233 = vpop.xlane.xlu0 %232
    %v234 = vadd.f32 %v149, %v150
    %235 = vadd.xlane.f32.xlu0 %v234
    %v236 = vpop.xlane.xlu0 %235
    %v237 = vadd.f32 %v151, %v152
    %238 = vadd.xlane.f32.xlu0 %v237
    %v239 = vpop.xlane.xlu0 %238
    %v240 = vadd.f32 %v153, %v154
    %241 = vadd.xlane.f32.xlu0 %v240
    %v242 = vpop.xlane.xlu0 %241
    %v243 = vadd.f32 %v155, %v156
    %244 = vadd.xlane.f32.xlu0 %v243
    %v245 = vpop.xlane.xlu0 %244
    %v246 = vadd.f32 %v157, %v158
    %247 = vadd.xlane.f32.xlu0 %v246
    %v248 = vpop.xlane.xlu0 %247
    %v249 = vadd.f32 %v159, %v160
    %250 = vadd.xlane.f32.xlu0 %v249
    %v251 = vpop.xlane.xlu0 %250
    %v252 = vadd.f32 %v161, %v162
    %253 = vadd.xlane.f32.xlu0 %v252
    %v254 = vpop.xlane.xlu0 %253
    %v255 = vadd.f32 %v163, %v164
    %256 = vadd.xlane.f32.xlu0 %v255
    %v257 = vpop.xlane.xlu0 %256
    %v258 = vadd.f32 %v165, %v166
    %259 = vadd.xlane.f32.xlu0 %v258
    %v260 = vpop.xlane.xlu0 %259
    %v261 = vadd.f32 %v167, %v168
    %262 = vadd.xlane.f32.xlu0 %v261
    %v263 = vpop.xlane.xlu0 %262
    %v264 = vadd.f32 %v169, %v170
    %265 = vadd.xlane.f32.xlu0 %v264
    %v266 = vpop.xlane.xlu0 %265
    %p267 = scmp.eq.s32.totalorder 0, 0
    // Predicated region
    $region18: #{model_forward.1} parent=1 // pred_check
      %p268 = pneg %p267
    $region19: #{model_forward.1} parent=1 // pred_check_branch
      %270 = sbr.rel (%p268) target = $region21
    $region20: #{model_forward.1} parent=1 // pred_region
      %v303 = vlaneseq
      %v304 = vand.u32 %v303, 127
      %v305 = vlaneseq
      %v306 = vshrl.u32 %v305, 7
      %v307 = vsub.s32 %v304, %v306
      %v308 = vrot.slane %v173, %v307
      %v309 = vadd.s32 %v304, 4294967288
      %v310 = vlaneseq
      %v311 = vshrl.u32 %v310, 7
      %v312 = vsub.s32 %v309, %v311
      %v313 = vrot.slane %v176, %v312
      %vm314 = vcmask 130112
      %v315 = vsel %vm314, %v313, %v308
      %v316 = vlaneseq
      %v317 = vshrl.u32 %v316, 7
      %v318 = vsub.s32 %v304, %v317
      %v319 = vrot.slane %v179, %v318
      %v320 = vlaneseq
      %v321 = vshrl.u32 %v320, 7
      %v322 = vsub.s32 %v309, %v321
      %v323 = vrot.slane %v182, %v322
      %v324 = vsel %vm314, %v323, %v319
      %v325 = vlaneseq
      %v326 = vshrl.u32 %v325, 7
      %v327 = vsub.s32 %v304, %v326
      %v328 = vrot.slane %v185, %v327
      %v329 = vlaneseq
      %v330 = vshrl.u32 %v329, 7
      %v331 = vsub.s32 %v309, %v330
      %v332 = vrot.slane %v188, %v331
      %v333 = vsel %vm314, %v332, %v328
      %v334 = vlaneseq
      %v335 = vshrl.u32 %v334, 7
      %v336 = vsub.s32 %v304, %v335
      %v337 = vrot.slane %v191, %v336
      %v338 = vlaneseq
      %v339 = vshrl.u32 %v338, 7
      %v340 = vsub.s32 %v309, %v339
      %v341 = vrot.slane %v194, %v340
      %v342 = vsel %vm314, %v341, %v337
      %v343 = vlaneseq
      %v344 = vshrl.u32 %v343, 7
      %v345 = vsub.s32 %v304, %v344
      %v346 = vrot.slane %v197, %v345
      %v347 = vlaneseq
      %v348 = vshrl.u32 %v347, 7
      %v349 = vsub.s32 %v309, %v348
      %v350 = vrot.slane %v200, %v349
      %v351 = vsel %vm314, %v350, %v346
      %v352 = vlaneseq
      %v353 = vshrl.u32 %v352, 7
      %v354 = vsub.s32 %v304, %v353
      %v355 = vrot.slane %v203, %v354
      %v356 = vlaneseq
      %v357 = vshrl.u32 %v356, 7
      %v358 = vsub.s32 %v309, %v357
      %v359 = vrot.slane %v206, %v358
      %v360 = vsel %vm314, %v359, %v355
      %v361 = vlaneseq
      %v362 = vshrl.u32 %v361, 7
      %v363 = vsub.s32 %v304, %v362
      %v364 = vrot.slane %v209, %v363
      %v365 = vlaneseq
      %v366 = vshrl.u32 %v365, 7
      %v367 = vsub.s32 %v309, %v366
      %v368 = vrot.slane %v212, %v367
      %v369 = vsel %vm314, %v368, %v364
      %v370 = vlaneseq
      %v371 = vshrl.u32 %v370, 7
      %v372 = vsub.s32 %v304, %v371
      %v373 = vrot.slane %v215, %v372
      %v374 = vlaneseq
      %v375 = vshrl.u32 %v374, 7
      %v376 = vsub.s32 %v309, %v375
      %v377 = vrot.slane %v218, %v376
      %v378 = vsel %vm314, %v377, %v373
      %v379 = vlaneseq
      %v380 = vshrl.u32 %v379, 7
      %v381 = vsub.s32 %v304, %v380
      %v382 = vrot.slane %v221, %v381
      %v383 = vlaneseq
      %v384 = vshrl.u32 %v383, 7
      %v385 = vsub.s32 %v309, %v384
      %v386 = vrot.slane %v224, %v385
      %v387 = vsel %vm314, %v386, %v382
      %v388 = vlaneseq
      %v389 = vshrl.u32 %v388, 7
      %v390 = vsub.s32 %v304, %v389
      %v391 = vrot.slane %v227, %v390
      %v392 = vlaneseq
      %v393 = vshrl.u32 %v392, 7
      %v394 = vsub.s32 %v309, %v393
      %v395 = vrot.slane %v230, %v394
      %v396 = vsel %vm314, %v395, %v391
      %v397 = vlaneseq
      %v398 = vshrl.u32 %v397, 7
      %v399 = vsub.s32 %v304, %v398
      %v400 = vrot.slane %v233, %v399
      %v401 = vlaneseq
      %v402 = vshrl.u32 %v401, 7
      %v403 = vsub.s32 %v309, %v402
      %v404 = vrot.slane %v236, %v403
      %v405 = vsel %vm314, %v404, %v400
      %v406 = vlaneseq
      %v407 = vshrl.u32 %v406, 7
      %v408 = vsub.s32 %v304, %v407
      %v409 = vrot.slane %v239, %v408
      %v410 = vlaneseq
      %v411 = vshrl.u32 %v410, 7
      %v412 = vsub.s32 %v309, %v411
      %v413 = vrot.slane %v242, %v412
      %v414 = vsel %vm314, %v413, %v409
      %v415 = vlaneseq
      %v416 = vshrl.u32 %v415, 7
      %v417 = vsub.s32 %v304, %v416
      %v418 = vrot.slane %v245, %v417
      %v419 = vlaneseq
      %v420 = vshrl.u32 %v419, 7
      %v421 = vsub.s32 %v309, %v420
      %v422 = vrot.slane %v248, %v421
      %v423 = vsel %vm314, %v422, %v418
      %v424 = vlaneseq
      %v425 = vshrl.u32 %v424, 7
      %v426 = vsub.s32 %v304, %v425
      %v427 = vrot.slane %v251, %v426
      %v428 = vlaneseq
      %v429 = vshrl.u32 %v428, 7
      %v430 = vsub.s32 %v309, %v429
      %v431 = vrot.slane %v254, %v430
      %v432 = vsel %vm314, %v431, %v427
      %v433 = vlaneseq
      %v434 = vshrl.u32 %v433, 7
      %v435 = vsub.s32 %v304, %v434
      %v436 = vrot.slane %v257, %v435
      %v437 = vlaneseq
      %v438 = vshrl.u32 %v437, 7
      %v439 = vsub.s32 %v309, %v438
      %v440 = vrot.slane %v260, %v439
      %v441 = vsel %vm314, %v440, %v436
      %v442 = vlaneseq
      %v443 = vshrl.u32 %v442, 7
      %v444 = vsub.s32 %v304, %v443
      %v445 = vrot.slane %v263, %v444
      %v446 = vlaneseq
      %v447 = vshrl.u32 %v446, 7
      %v448 = vsub.s32 %v309, %v447
      %v449 = vrot.slane %v266, %v448
      %v450 = vsel %vm314, %v449, %v445
      %vm451 = vcmask 1041409
      %v452 = vsel %vm451, %v324, %v315
      %vm453 = vcmask 1042434
      %v454 = vsel %vm453, %v333, %v452
      %vm455 = vcmask 1043459
      %v456 = vsel %vm455, %v342, %v454
      %vm457 = vcmask 1044484
      %v458 = vsel %vm457, %v351, %v456
      %vm459 = vcmask 1045509
      %v460 = vsel %vm459, %v360, %v458
      %vm461 = vcmask 1046534
      %v462 = vsel %vm461, %v369, %v460
      %vm463 = vcmask 1047559
      %v464 = vsel %vm463, %v378, %v462
      %v465 = vsel %vm451, %v396, %v387
      %v466 = vsel %vm453, %v405, %v465
      %v467 = vsel %vm455, %v414, %v466
      %v468 = vsel %vm457, %v423, %v467
      %v469 = vsel %vm459, %v432, %v468
      %v470 = vsel %vm461, %v441, %v469
      %v471 = vsel %vm463, %v450, %v470
      %vm474 = vcmask 130048
      %475 = vst.msk [vmem:[%s3] sm:$0xff] %vm474, %v464
      %476 = vst.msk [vmem:[%s3 + $0x8] sm:$0xff] %vm474, %v471
    $region21: #{model_forward.1} parent=1 // pred_fallthru
      _
    %p477 = scmp.gt.s32.totalorder 0, 0
    // Predicated region
    $region22: #{model_forward.1} parent=1 // pred_check
      %p478 = pneg %p477
    $region23: #{model_forward.1} parent=1 // pred_check_branch
      %480 = sbr.rel (%p478) target = $region25
    $region24: #{model_forward.1} parent=1 // pred_region
      %v481 = vld [vmem:[%s3] sm:$0xff]
      %v482 = vld [vmem:[%s3 + $0x8] sm:$0xff]
      %v515 = vlaneseq
      %v516 = vand.u32 %v515, 127
      %v517 = vlaneseq
      %v518 = vshrl.u32 %v517, 7
      %v519 = vsub.s32 %v516, %v518
      %v520 = vrot.slane %v173, %v519
      %v521 = vadd.s32 %v516, 4294967288
      %v522 = vlaneseq
      %v523 = vshrl.u32 %v522, 7
      %v524 = vsub.s32 %v521, %v523
      %v525 = vrot.slane %v176, %v524
      %vm526 = vcmask 130112
      %v527 = vsel %vm526, %v525, %v520
      %v528 = vlaneseq
      %v529 = vshrl.u32 %v528, 7
      %v530 = vsub.s32 %v516, %v529
      %v531 = vrot.slane %v179, %v530
      %v532 = vlaneseq
      %v533 = vshrl.u32 %v532, 7
      %v534 = vsub.s32 %v521, %v533
      %v535 = vrot.slane %v182, %v534
      %v536 = vsel %vm526, %v535, %v531
      %v537 = vlaneseq
      %v538 = vshrl.u32 %v537, 7
      %v539 = vsub.s32 %v516, %v538
      %v540 = vrot.slane %v185, %v539
      %v541 = vlaneseq
      %v542 = vshrl.u32 %v541, 7
      %v543 = vsub.s32 %v521, %v542
      %v544 = vrot.slane %v188, %v543
      %v545 = vsel %vm526, %v544, %v540
      %v546 = vlaneseq
      %v547 = vshrl.u32 %v546, 7
      %v548 = vsub.s32 %v516, %v547
      %v549 = vrot.slane %v191, %v548
      %v550 = vlaneseq
      %v551 = vshrl.u32 %v550, 7
      %v552 = vsub.s32 %v521, %v551
      %v553 = vrot.slane %v194, %v552
      %v554 = vsel %vm526, %v553, %v549
      %v555 = vlaneseq
      %v556 = vshrl.u32 %v555, 7
      %v557 = vsub.s32 %v516, %v556
      %v558 = vrot.slane %v197, %v557
      %v559 = vlaneseq
      %v560 = vshrl.u32 %v559, 7
      %v561 = vsub.s32 %v521, %v560
      %v562 = vrot.slane %v200, %v561
      %v563 = vsel %vm526, %v562, %v558
      %v564 = vlaneseq
      %v565 = vshrl.u32 %v564, 7
      %v566 = vsub.s32 %v516, %v565
      %v567 = vrot.slane %v203, %v566
      %v568 = vlaneseq
      %v569 = vshrl.u32 %v568, 7
      %v570 = vsub.s32 %v521, %v569
      %v571 = vrot.slane %v206, %v570
      %v572 = vsel %vm526, %v571, %v567
      %v573 = vlaneseq
      %v574 = vshrl.u32 %v573, 7
      %v575 = vsub.s32 %v516, %v574
      %v576 = vrot.slane %v209, %v575
      %v577 = vlaneseq
      %v578 = vshrl.u32 %v577, 7
      %v579 = vsub.s32 %v521, %v578
      %v580 = vrot.slane %v212, %v579
      %v581 = vsel %vm526, %v580, %v576
      %v582 = vlaneseq
      %v583 = vshrl.u32 %v582, 7
      %v584 = vsub.s32 %v516, %v583
      %v585 = vrot.slane %v215, %v584
      %v586 = vlaneseq
      %v587 = vshrl.u32 %v586, 7
      %v588 = vsub.s32 %v521, %v587
      %v589 = vrot.slane %v218, %v588
      %v590 = vsel %vm526, %v589, %v585
      %v591 = vlaneseq
      %v592 = vshrl.u32 %v591, 7
      %v593 = vsub.s32 %v516, %v592
      %v594 = vrot.slane %v221, %v593
      %v595 = vlaneseq
      %v596 = vshrl.u32 %v595, 7
      %v597 = vsub.s32 %v521, %v596
      %v598 = vrot.slane %v224, %v597
      %v599 = vsel %vm526, %v598, %v594
      %v600 = vlaneseq
      %v601 = vshrl.u32 %v600, 7
      %v602 = vsub.s32 %v516, %v601
      %v603 = vrot.slane %v227, %v602
      %v604 = vlaneseq
      %v605 = vshrl.u32 %v604, 7
      %v606 = vsub.s32 %v521, %v605
      %v607 = vrot.slane %v230, %v606
      %v608 = vsel %vm526, %v607, %v603
      %v609 = vlaneseq
      %v610 = vshrl.u32 %v609, 7
      %v611 = vsub.s32 %v516, %v610
      %v612 = vrot.slane %v233, %v611
      %v613 = vlaneseq
      %v614 = vshrl.u32 %v613, 7
      %v615 = vsub.s32 %v521, %v614
      %v616 = vrot.slane %v236, %v615
      %v617 = vsel %vm526, %v616, %v612
      %v618 = vlaneseq
      %v619 = vshrl.u32 %v618, 7
      %v620 = vsub.s32 %v516, %v619
      %v621 = vrot.slane %v239, %v620
      %v622 = vlaneseq
      %v623 = vshrl.u32 %v622, 7
      %v624 = vsub.s32 %v521, %v623
      %v625 = vrot.slane %v242, %v624
      %v626 = vsel %vm526, %v625, %v621
      %v627 = vlaneseq
      %v628 = vshrl.u32 %v627, 7
      %v629 = vsub.s32 %v516, %v628
      %v630 = vrot.slane %v245, %v629
      %v631 = vlaneseq
      %v632 = vshrl.u32 %v631, 7
      %v633 = vsub.s32 %v521, %v632
      %v634 = vrot.slane %v248, %v633
      %v635 = vsel %vm526, %v634, %v630
      %v636 = vlaneseq
      %v637 = vshrl.u32 %v636, 7
      %v638 = vsub.s32 %v516, %v637
      %v639 = vrot.slane %v251, %v638
      %v640 = vlaneseq
      %v641 = vshrl.u32 %v640, 7
      %v642 = vsub.s32 %v521, %v641
      %v643 = vrot.slane %v254, %v642
      %v644 = vsel %vm526, %v643, %v639
      %v645 = vlaneseq
      %v646 = vshrl.u32 %v645, 7
      %v647 = vsub.s32 %v516, %v646
      %v648 = vrot.slane %v257, %v647
      %v649 = vlaneseq
      %v650 = vshrl.u32 %v649, 7
      %v651 = vsub.s32 %v521, %v650
      %v652 = vrot.slane %v260, %v651
      %v653 = vsel %vm526, %v652, %v648
      %v654 = vlaneseq
      %v655 = vshrl.u32 %v654, 7
      %v656 = vsub.s32 %v516, %v655
      %v657 = vrot.slane %v263, %v656
      %v658 = vlaneseq
      %v659 = vshrl.u32 %v658, 7
      %v660 = vsub.s32 %v521, %v659
      %v661 = vrot.slane %v266, %v660
      %v662 = vsel %vm526, %v661, %v657
      %vm663 = vcmask 1041409
      %v664 = vsel %vm663, %v536, %v527
      %vm665 = vcmask 1042434
      %v666 = vsel %vm665, %v545, %v664
      %vm667 = vcmask 1043459
      %v668 = vsel %vm667, %v554, %v666
      %vm669 = vcmask 1044484
      %v670 = vsel %vm669, %v563, %v668
      %vm671 = vcmask 1045509
      %v672 = vsel %vm671, %v572, %v670
      %vm673 = vcmask 1046534
      %v674 = vsel %vm673, %v581, %v672
      %vm675 = vcmask 1047559
      %v676 = vsel %vm675, %v590, %v674
      %v677 = vsel %vm663, %v608, %v599
      %v678 = vsel %vm665, %v617, %v677
      %v679 = vsel %vm667, %v626, %v678
      %v680 = vsel %vm669, %v635, %v679
      %v681 = vsel %vm671, %v644, %v680
      %v682 = vsel %vm673, %v653, %v681
      %v683 = vsel %vm675, %v662, %v682
      %v686 = vadd.f32 %v481, %v676
      %v687 = vadd.f32 %v482, %v683
      %vm688 = vcmask 130048
      %689 = vst.msk [vmem:[%s3] sm:$0xff] %vm688, %v686
      %690 = vst.msk [vmem:[%s3 + $0x8] sm:$0xff] %vm688, %v687
    $region25: #{model_forward.1} parent=1 // pred_fallthru
      _
    // Predicated region
    $region26: #{model_forward.1} parent=1 // pred_check
      %p691 = pneg %p267
    $region27: #{model_forward.1} parent=1 // pred_check_branch
      %693 = sbr.rel (%p691) target = $region29
    $region28: #{model_forward.1} parent=1 // pred_region
      %v694 = vld [vmem:[%s3] sm:$0xff]
      %v695 = vld [vmem:[%s3 + $0x8] sm:$0xff]
      %vm696 = vcmask 130048
      %v697 = vsel %vm696, %v694, -inf
      %698 = vmax.xlane.f32.xlu0 %v697
      %v699 = vpop.xlane.xlu0 %698
      %v700 = vsel %vm696, %v695, -inf
      %701 = vmax.xlane.f32.xlu0 %v700
      %v702 = vpop.xlane.xlu0 %701
      %v703 = vsub.f32 %v694, %v699
      %v704 = vsub.f32 %v695, %v702
      %v705 = vmul.f32 %v703, 1.442695
      %v706 = vpow.pop %v705
      %v707 = vmul.f32 %v704, 1.442695
      %v708 = vpow.pop %v707
      %v709 = vsel %vm696, %v706, 0.0
      %710 = vadd.xlane.f32.xlu0 %v709
      %v711 = vpop.xlane.xlu0 %710
      %v712 = vsel %vm696, %v708, 0.0
      %713 = vadd.xlane.f32.xlu0 %v712
      %v714 = vpop.xlane.xlu0 %713
      %v715 = vrcp.pop %v711
      %v716 = vmul.f32 %v706, %v715
      %v717 = vrcp.pop %v714
      %v718 = vmul.f32 %v708, %v717
      %v719 = vld [vmem:[%s2] sm:$0x1]
      %v721 = vlaneseq
      %v722 = vshrl.u32 %v721, 7
      %v723 = vsub.s32 0, %v722
      %v724 = vrot.slane %v719, %v723
      %v726 = vmul.f32 %v716, %v724
      %v727 = vmul.f32 %v718, %v724
      %v728 = vsel %vm696, %v726, 0.0
      %729 = vadd.xlane.f32.xlu0 %v728
      %v730 = vpop.xlane.xlu0 %729
      %v731 = vsel %vm696, %v727, 0.0
      %732 = vadd.xlane.f32.xlu0 %v731
      %v733 = vpop.xlane.xlu0 %732
      %vm734 = vcmask 7168
      %735 = vst.msk [vmem:[%s4] sm:$0xff] %vm734, %v730
      %736 = vst.msk [vmem:[%s4 + $0x8] sm:$0xff] %vm734, %v733
    $region29: #{model_forward.1} parent=1 // pred_fallthru
      _
    // Predicated region
    $region30: #{model_forward.1} parent=1 // pred_check
      _
    $region31: #{model_forward.1} parent=1 // pred_check_branch
      %738 = sbr.rel (0) target = $region33
    $region32: #{model_forward.1} parent=1 // pred_region
      _
    $region33: #{model_forward.1} parent=1 // pred_fallthru
      _
    // Predicated region
    $region34: #{model_forward.1} parent=1 // pred_check
      _
    $region35: #{model_forward.1} parent=1 // pred_check_branch
      %740 = sbr.rel (0) target = $region37
    $region36: #{model_forward.1} parent=1 // pred_region
      _
    $region37: #{model_forward.1} parent=1 // pred_fallthru
      _
    // Predicated region
    $region38: #{model_forward.1} parent=1 // pred_check
      _
    $region39: #{model_forward.1} parent=1 // pred_check_branch
      %742 = sbr.rel (0) target = $region41
    $region40: #{model_forward.1} parent=1 // pred_region
      _
    $region41: #{model_forward.1} parent=1 // pred_fallthru
      _
    // Predicated region
    $region42: #{model_forward.1} parent=1 // pred_check
      _
    $region43: #{model_forward.1} parent=1 // pred_check_branch
      %744 = sbr.rel (0) target = $region45
    $region44: #{model_forward.1} parent=1 // pred_region
      _
    $region45: #{model_forward.1} parent=1 // pred_fallthru
      _
    %745 = vsyncpa [#allocation3], 1

</llo_original>
